<compile_context>
chip_gen: v5e
topology: v5e:2x2
jax: 0.10.0
libtpu: 0.0.40
codegen_flags: <defaults>
</compile_context>

<pallas_src>
import functools

import jax
import jax.numpy as jnp
from jax import lax
from jax.experimental import pallas as pl
from jax.experimental.pallas import tpu as pltpu


def clip_loss_kernel(scale_ref, img_ref, txt_ref, loss_ref,
                     m_row, s_row, m_col, s_col, acc, *, n_total):
    # scale_ref: SMEM (1,) f32
    # img_ref / txt_ref: VMEM (T, D) tiles (native dtype)
    # loss_ref: VMEM (1, 1) f32 output (resident across the whole grid)
    # m_row/s_row: VMEM (T, 1) f32    row-LSE accumulators (per row tile)
    # m_col/s_col: VMEM (J, 1, T) f32 col-LSE accumulators (persist across rows)
    # acc: VMEM (1, 1) f32            global loss accumulator
    i = pl.program_id(0)
    j = pl.program_id(1)
    n_i = pl.num_programs(0)
    n_j = pl.num_programs(1)

    scale = scale_ref[0]
    img = img_ref[...]                               # (T, D) native dtype
    txt = txt_ref[...]                               # (T, D) native dtype
    # Fold logit_scale into the feature tile (O(T*D)) instead of the logits.
    simg = img * scale.astype(img.dtype)

    # (T, T) logits tile on the MXU; contract over D without transposing txt.
    logits = lax.dot_general(
        simg, txt, (((1,), (1,)), ((), ())),
        preferred_element_type=jnp.float32)

    neg_inf = jnp.float32(-jnp.inf)

    @pl.when(jnp.logical_and(i == 0, j == 0))
    def _init_global():
        acc[...] = jnp.zeros_like(acc)

    # ---- online row logsumexp (logits_per_image CE term) --------------------
    @pl.when(j == 0)
    def _init_row():
        m_row[...] = jnp.full_like(m_row, neg_inf)
        s_row[...] = jnp.zeros_like(s_row)

    tile_rmax = jnp.max(logits, axis=1, keepdims=True)            # (T, 1)
    m_row_new = jnp.maximum(m_row[...], tile_rmax)
    s_row[...] = (s_row[...] * jnp.exp(m_row[...] - m_row_new)
                  + jnp.sum(jnp.exp(logits - m_row_new), axis=1, keepdims=True))
    m_row[...] = m_row_new

    # ---- online column logsumexp (logits_per_text CE term) ------------------
    @pl.when(i == 0)
    def _init_col():
        m_col[j] = jnp.full(m_col.shape[1:], neg_inf, dtype=m_col.dtype)
        s_col[j] = jnp.zeros(s_col.shape[1:], dtype=s_col.dtype)

    mc = m_col[j]                                                  # (1, T)
    sc = s_col[j]
    tile_cmax = jnp.max(logits, axis=0, keepdims=True)             # (1, T)
    m_col_new = jnp.maximum(mc, tile_cmax)
    s_col[j] = (sc * jnp.exp(mc - m_col_new)
                + jnp.sum(jnp.exp(logits - m_col_new), axis=0, keepdims=True))
    m_col[j] = m_col_new

    # ---- diagonal targets (labels = arange(N)): diag(L) == diag(L.T) --------
    @pl.when(i == j)
    def _diag():
        d = jnp.sum(simg.astype(jnp.float32) * txt.astype(jnp.float32))
        acc[...] += -2.0 * d

    # ---- finalize row tile ---------------------------------------------------
    @pl.when(j == n_j - 1)
    def _fin_row():
        acc[...] += jnp.sum(m_row[...] + jnp.log(s_row[...]))

    # ---- finalize column tile ------------------------------------------------
    @pl.when(i == n_i - 1)
    def _fin_col():
        acc[...] += jnp.sum(m_col[j] + jnp.log(s_col[j]))

    # ---- write scalar loss ---------------------------------------------------
    @pl.when(jnp.logical_and(i == n_i - 1, j == n_j - 1))
    def _write():
        loss_ref[...] = acc[...] * jnp.float32(0.5 / n_total)


def _pick_tile(n):
    for t in (512, 256, 128, 64, 32, 16, 8):
        if t <= n and n % t == 0:
            return t
    return n  # whole-array block (allowed even if not a multiple of 8)


def clip_loss(image_features, text_features, logit_scale, block_n=None):
    """ClipLoss(['cross_entropy']) forward, single device (world_size=1)."""
    n, d = image_features.shape
    assert text_features.shape == (n, d)
    if block_n is None:
        block_n = _pick_tile(n)
    assert n % block_n == 0, (n, block_n)
    grid_i = grid_j = n // block_n

    scale = jnp.asarray(logit_scale, jnp.float32).reshape(1)
    kernel = functools.partial(clip_loss_kernel, n_total=n)

    loss = pl.pallas_call(
        kernel,
        out_shape=jax.ShapeDtypeStruct((1, 1), jnp.float32),
        grid_spec=pltpu.PrefetchScalarGridSpec(
            num_scalar_prefetch=0,
            grid=(grid_i, grid_j),
            in_specs=[
                pl.BlockSpec(memory_space=pltpu.MemorySpace.SMEM),     # scale
                pl.BlockSpec((block_n, d), lambda i, j: (i, 0)),       # image
                pl.BlockSpec((block_n, d), lambda i, j: (j, 0)),       # text
            ],
            out_specs=pl.BlockSpec((1, 1), lambda i, j: (0, 0)),
            scratch_shapes=[
                pltpu.VMEM((block_n, 1), jnp.float32),                 # m_row
                pltpu.VMEM((block_n, 1), jnp.float32),                 # s_row
                pltpu.VMEM((grid_j, 1, block_n), jnp.float32),         # m_col
                pltpu.VMEM((grid_j, 1, block_n), jnp.float32),         # s_col
                pltpu.VMEM((1, 1), jnp.float32),                       # acc
            ],
        ),
        compiler_params=pltpu.CompilerParams(
            # Both grid axes carry accumulator dependencies (row / col LSE).
            dimension_semantics=("arbitrary", "arbitrary"),
        ),
    )(scale, image_features, text_features)
    return {"contrastive_loss": loss[0, 0]}


def clip_loss_ref(image_features, text_features, logit_scale):
    """Pure-JAX reference of the same forward pass."""
    img = image_features.astype(jnp.float32)
    txt = text_features.astype(jnp.float32)
    logits_i = logit_scale * img @ txt.T
    logits_t = logit_scale * txt @ img.T
    n = img.shape[0]
    labels = jnp.arange(n)

    def ce(lg):
        lse = jax.nn.logsumexp(lg, axis=-1)
        return jnp.mean(lse - lg[jnp.arange(n), labels])

    return 0.5 * (ce(logits_i) + ce(logits_t))


if __name__ == "__main__":
    key = jax.random.PRNGKey(0)
    k_img, k_txt = jax.random.split(key)

    N, D = 64, 32          # small batch / embedding dim
    BLOCK_N = 16           # 4x4 grid -> exercises init / diag / finalize paths
    image_features = jax.random.normal(k_img, (N, D), dtype=jnp.float32)
    text_features = jax.random.normal(k_txt, (N, D), dtype=jnp.float32)
    # CLIP-style L2 normalization of features (done upstream of the loss module).
    image_features = image_features / jnp.linalg.norm(image_features, axis=-1, keepdims=True)
    text_features = text_features / jnp.linalg.norm(text_features, axis=-1, keepdims=True)
    logit_scale = jnp.float32(jnp.exp(jnp.float32(0.07 * 10.0)))  # deterministic scalar

    out = clip_loss(image_features, text_features, logit_scale, block_n=BLOCK_N)
    loss = jax.block_until_ready(out["contrastive_loss"])

    ref = jax.block_until_ready(clip_loss_ref(image_features, text_features, logit_scale))
    assert jnp.allclose(loss, ref, rtol=1e-5, atol=1e-5), (loss, ref)
    print("KERNEL_OK")
</pallas_src>

<mosaic_0001>
module attributes {stable_mosaic.version = 11 : i64} {
  func.func @clip_loss_kernel(%arg0: i32, %arg1: i32, %arg2: memref<1xf32, #tpu.memory_space<smem>>, %arg3: memref<16x32xf32, #tpu.memory_space<vmem>>, %arg4: memref<16x32xf32, #tpu.memory_space<vmem>>, %arg5: memref<1x1xf32, #tpu.memory_space<vmem>>, %arg6: memref<16x1xf32, #tpu.memory_space<vmem>>, %arg7: memref<16x1xf32, #tpu.memory_space<vmem>>, %arg8: memref<4x1x16xf32, #tpu.memory_space<vmem>>, %arg9: memref<4x1x16xf32, #tpu.memory_space<vmem>>, %arg10: memref<1x1xf32, #tpu.memory_space<vmem>>) attributes {dimension_semantics = [#tpu.dimension_semantics<arbitrary>, #tpu.dimension_semantics<arbitrary>], iteration_bounds = array<i64: 4, 4>, scalar_prefetch = 0 : i64, scratch_operands = 5 : i64, tpu.core_type = #tpu.core_type<tc>, window_params = [{transform_indices = @transform_0, window_bounds = array<i64: 1>}, {transform_indices = @transform_1, window_bounds = array<i64: 16, 32>}, {transform_indices = @transform_2, window_bounds = array<i64: 16, 32>}, {pipeline_mode = #tpu.pipeline_mode<synchronous>, transform_indices = @transform_3, window_bounds = array<i64: 1, 1>}]} {
    %c0 = arith.constant 0 : index
    %0 = memref.load %arg2[%c0] : memref<1xf32, #tpu.memory_space<smem>>
    %c0_0 = arith.constant 0 : index
    %c0_1 = arith.constant 0 : index
    %1 = vector.load %arg3[%c0_0, %c0_1] : memref<16x32xf32, #tpu.memory_space<vmem>>, vector<16x32xf32>
    %c0_2 = arith.constant 0 : index
    %c0_3 = arith.constant 0 : index
    %2 = vector.load %arg4[%c0_2, %c0_3] : memref<16x32xf32, #tpu.memory_space<vmem>>, vector<16x32xf32>
    %3 = vector.broadcast %0 : f32 to vector<16x32xf32>
    %4 = arith.mulf %1, %3 : vector<16x32xf32>
    %cst = arith.constant dense<0.000000e+00> : vector<16x16xf32>
    %5 = tpu.matmul %4, %2, %cst {dimension_numbers = #tpu.dot_dimension_numbers<[1], [1], [0], [0], [0, 0, 1, 0], [], []>} : vector<16x32xf32>, vector<16x32xf32>, vector<16x16xf32> -> vector<16x16xf32>
    %c0_i32 = arith.constant 0 : i32
    %6 = arith.cmpi eq, %arg0, %c0_i32 : i32
    %c0_i32_4 = arith.constant 0 : i32
    %7 = arith.cmpi eq, %arg1, %c0_i32_4 : i32
    %8 = arith.andi %6, %7 : i1
    %9 = arith.extui %8 : i1 to i32
    %c0_i32_5 = arith.constant 0 : i32
    %10 = arith.cmpi ne, %9, %c0_i32_5 : i32
    scf.if %10 {
      %cst_41 = arith.constant 0.000000e+00 : f32
      %74 = vector.broadcast %cst_41 : f32 to vector<1x1xf32>
      %c0_42 = arith.constant 0 : index
      %c0_43 = arith.constant 0 : index
      %75 = vector.load %arg10[%c0_42, %c0_43] : memref<1x1xf32, #tpu.memory_space<vmem>>, vector<1x1xf32>
      tpu.vector_store %arg10[%c0_42, %c0_43], %74 {strides = array<i32>} : memref<1x1xf32, #tpu.memory_space<vmem>>, vector<1x1xf32>,
    } else {
    }
    %c0_i32_6 = arith.constant 0 : i32
    %11 = arith.cmpi eq, %arg1, %c0_i32_6 : i32
    %12 = arith.extui %11 : i1 to i32
    %cst_7 = arith.constant 0xFF800000 : f32
    %c0_i32_8 = arith.constant 0 : i32
    %13 = arith.cmpi ne, %12, %c0_i32_8 : i32
    scf.if %13 {
      %74 = vector.broadcast %cst_7 : f32 to vector<16x1xf32>
      %c0_41 = arith.constant 0 : index
      %c0_42 = arith.constant 0 : index
      %75 = vector.load %arg6[%c0_41, %c0_42] : memref<16x1xf32, #tpu.memory_space<vmem>>, vector<16x1xf32>
      tpu.vector_store %arg6[%c0_41, %c0_42], %74 {strides = array<i32>} : memref<16x1xf32, #tpu.memory_space<vmem>>, vector<16x1xf32>,
      %cst_43 = arith.constant 0.000000e+00 : f32
      %76 = vector.broadcast %cst_43 : f32 to vector<16x1xf32>
      %c0_44 = arith.constant 0 : index
      %c0_45 = arith.constant 0 : index
      %77 = vector.load %arg7[%c0_44, %c0_45] : memref<16x1xf32, #tpu.memory_space<vmem>>, vector<16x1xf32>
      tpu.vector_store %arg7[%c0_44, %c0_45], %76 {strides = array<i32>} : memref<16x1xf32, #tpu.memory_space<vmem>>, vector<16x1xf32>,
    } else {
    }
    %cst_9 = arith.constant dense<0xFF800000> : vector<16xf32>
    %14 = vector.multi_reduction <maximumf>, %5, %cst_9 [1] : vector<16x16xf32> to vector<16xf32>
    %15 = vector.shape_cast %14 : vector<16xf32> to vector<16x1xf32>
    %c0_10 = arith.constant 0 : index
    %c0_11 = arith.constant 0 : index
    %16 = vector.load %arg6[%c0_10, %c0_11] : memref<16x1xf32, #tpu.memory_space<vmem>>, vector<16x1xf32>
    %17 = arith.maximumf %16, %15 : vector<16x1xf32>
    %c0_12 = arith.constant 0 : index
    %c0_13 = arith.constant 0 : index
    %18 = vector.load %arg7[%c0_12, %c0_13] : memref<16x1xf32, #tpu.memory_space<vmem>>, vector<16x1xf32>
    %c0_14 = arith.constant 0 : index
    %c0_15 = arith.constant 0 : index
    %19 = vector.load %arg6[%c0_14, %c0_15] : memref<16x1xf32, #tpu.memory_space<vmem>>, vector<16x1xf32>
    %20 = arith.subf %19, %17 : vector<16x1xf32>
    %21 = math.exp %20 : vector<16x1xf32>
    %22 = arith.mulf %18, %21 : vector<16x1xf32>
    %23 = vector.broadcast %17 : vector<16x1xf32> to vector<16x16xf32>
    %24 = arith.subf %5, %23 : vector<16x16xf32>
    %25 = math.exp %24 : vector<16x16xf32>
    %cst_16 = arith.constant dense<0.000000e+00> : vector<16xf32>
    %26 = vector.multi_reduction <add>, %25, %cst_16 [1] : vector<16x16xf32> to vector<16xf32>
    %27 = vector.shape_cast %26 : vector<16xf32> to vector<16x1xf32>
    %28 = arith.addf %22, %27 : vector<16x1xf32>
    %c0_17 = arith.constant 0 : index
    %c0_18 = arith.constant 0 : index
    %29 = vector.load %arg7[%c0_17, %c0_18] : memref<16x1xf32, #tpu.memory_space<vmem>>, vector<16x1xf32>
    tpu.vector_store %arg7[%c0_17, %c0_18], %28 {strides = array<i32>} : memref<16x1xf32, #tpu.memory_space<vmem>>, vector<16x1xf32>,
    %c0_19 = arith.constant 0 : index
    %c0_20 = arith.constant 0 : index
    %30 = vector.load %arg6[%c0_19, %c0_20] : memref<16x1xf32, #tpu.memory_space<vmem>>, vector<16x1xf32>
    tpu.vector_store %arg6[%c0_19, %c0_20], %17 {strides = array<i32>} : memref<16x1xf32, #tpu.memory_space<vmem>>, vector<16x1xf32>,
    %c0_i32_21 = arith.constant 0 : i32
    %31 = arith.cmpi eq, %arg0, %c0_i32_21 : i32
    %32 = arith.extui %31 : i1 to i32
    %cst_22 = arith.constant 0xFF800000 : f32
    %c0_i32_23 = arith.constant 0 : i32
    %33 = arith.cmpi ne, %32, %c0_i32_23 : i32
    scf.if %33 {
      %74 = vector.broadcast %cst_22 : f32 to vector<1x16xf32>
      %75 = arith.index_cast %arg1 : i32 to index
      %c0_41 = arith.constant 0 : index
      %c0_42 = arith.constant 0 : index
      %76 = vector.load %arg8[%75, %c0_41, %c0_42] : memref<4x1x16xf32, #tpu.memory_space<vmem>>, vector<1x1x16xf32>
      %77 = vector.shape_cast %76 : vector<1x1x16xf32> to vector<1x16xf32>
      %78 = vector.shape_cast %74 : vector<1x16xf32> to vector<1x1x16xf32>
      tpu.vector_store %arg8[%75, %c0_41, %c0_42], %78 {strides = array<i32>} : memref<4x1x16xf32, #tpu.memory_space<vmem>>, vector<1x1x16xf32>,
      %cst_43 = arith.constant 0.000000e+00 : f32
      %79 = vector.broadcast %cst_43 : f32 to vector<1x16xf32>
      %80 = arith.index_cast %arg1 : i32 to index
      %c0_44 = arith.constant 0 : index
      %c0_45 = arith.constant 0 : index
      %81 = vector.load %arg9[%80, %c0_44, %c0_45] : memref<4x1x16xf32, #tpu.memory_space<vmem>>, vector<1x1x16xf32>
      %82 = vector.shape_cast %81 : vector<1x1x16xf32> to vector<1x16xf32>
      %83 = vector.shape_cast %79 : vector<1x16xf32> to vector<1x1x16xf32>
      tpu.vector_store %arg9[%80, %c0_44, %c0_45], %83 {strides = array<i32>} : memref<4x1x16xf32, #tpu.memory_space<vmem>>, vector<1x1x16xf32>,
    } else {
    }
    %34 = arith.index_cast %arg1 : i32 to index
    %c0_24 = arith.constant 0 : index
    %c0_25 = arith.constant 0 : index
    %35 = vector.load %arg8[%34, %c0_24, %c0_25] : memref<4x1x16xf32, #tpu.memory_space<vmem>>, vector<1x1x16xf32>
    %36 = vector.shape_cast %35 : vector<1x1x16xf32> to vector<1x16xf32>
    %37 = arith.index_cast %arg1 : i32 to index
    %c0_26 = arith.constant 0 : index
    %c0_27 = arith.constant 0 : index
    %38 = vector.load %arg9[%37, %c0_26, %c0_27] : memref<4x1x16xf32, #tpu.memory_space<vmem>>, vector<1x1x16xf32>
    %39 = vector.shape_cast %38 : vector<1x1x16xf32> to vector<1x16xf32>
    %cst_28 = arith.constant dense<0xFF800000> : vector<16xf32>
    %40 = vector.multi_reduction <maximumf>, %5, %cst_28 [0] : vector<16x16xf32> to vector<16xf32>
    %41 = vector.shape_cast %40 : vector<16xf32> to vector<1x16xf32>
    %42 = arith.maximumf %36, %41 : vector<1x16xf32>
    %43 = arith.subf %36, %42 : vector<1x16xf32>
    %44 = math.exp %43 : vector<1x16xf32>
    %45 = arith.mulf %39, %44 : vector<1x16xf32>
    %46 = vector.broadcast %42 : vector<1x16xf32> to vector<16x16xf32>
    %47 = arith.subf %5, %46 : vector<16x16xf32>
    %48 = math.exp %47 : vector<16x16xf32>
    %cst_29 = arith.constant dense<0.000000e+00> : vector<16xf32>
    %49 = vector.multi_reduction <add>, %48, %cst_29 [0] : vector<16x16xf32> to vector<16xf32>
    %50 = vector.shape_cast %49 : vector<16xf32> to vector<1x16xf32>
    %51 = arith.addf %45, %50 : vector<1x16xf32>
    %52 = arith.index_cast %arg1 : i32 to index
    %c0_30 = arith.constant 0 : index
    %c0_31 = arith.constant 0 : index
    %53 = vector.load %arg9[%52, %c0_30, %c0_31] : memref<4x1x16xf32, #tpu.memory_space<vmem>>, vector<1x1x16xf32>
    %54 = vector.shape_cast %53 : vector<1x1x16xf32> to vector<1x16xf32>
    %55 = vector.shape_cast %51 : vector<1x16xf32> to vector<1x1x16xf32>
    tpu.vector_store %arg9[%52, %c0_30, %c0_31], %55 {strides = array<i32>} : memref<4x1x16xf32, #tpu.memory_space<vmem>>, vector<1x1x16xf32>,
    %56 = arith.index_cast %arg1 : i32 to index
    %c0_32 = arith.constant 0 : index
    %c0_33 = arith.constant 0 : index
    %57 = vector.load %arg8[%56, %c0_32, %c0_33] : memref<4x1x16xf32, #tpu.memory_space<vmem>>, vector<1x1x16xf32>
    %58 = vector.shape_cast %57 : vector<1x1x16xf32> to vector<1x16xf32>
    %59 = vector.shape_cast %42 : vector<1x16xf32> to vector<1x1x16xf32>
    tpu.vector_store %arg8[%56, %c0_32, %c0_33], %59 {strides = array<i32>} : memref<4x1x16xf32, #tpu.memory_space<vmem>>, vector<1x1x16xf32>,
    %60 = arith.cmpi eq, %arg0, %arg1 : i32
    %61 = arith.extui %60 : i1 to i32
    %c0_i32_34 = arith.constant 0 : i32
    %62 = arith.cmpi ne, %61, %c0_i32_34 : i32
    scf.if %62 {
      %74 = arith.mulf %4, %2 : vector<16x32xf32>
      %75 = vector.shape_cast %74 : vector<16x32xf32> to vector<1x16x32xf32>
      %cst_41 = arith.constant dense<0.000000e+00> : vector<1xf32>
      %76 = vector.multi_reduction <add>, %75, %cst_41 [1, 2] : vector<1x16x32xf32> to vector<1xf32>
      %77 = vector.shape_cast %76 : vector<1xf32> to vector<1x1x1xf32>
      %78 = vector.extract %77[0, 0, 0] : f32 from vector<1x1x1xf32>
      %c0_42 = arith.constant 0 : index
      %c0_43 = arith.constant 0 : index
      %79 = vector.load %arg10[%c0_42, %c0_43] : memref<1x1xf32, #tpu.memory_space<vmem>>, vector<1x1xf32>
      %cst_44 = arith.constant -2.000000e+00 : f32
      %80 = arith.mulf %cst_44, %78 : f32
      %81 = vector.broadcast %80 : f32 to vector<1x1xf32>
      %82 = arith.addf %79, %81 : vector<1x1xf32>
      %c0_45 = arith.constant 0 : index
      %c0_46 = arith.constant 0 : index
      %83 = vector.load %arg10[%c0_45, %c0_46] : memref<1x1xf32, #tpu.memory_space<vmem>>, vector<1x1xf32>
      tpu.vector_store %arg10[%c0_45, %c0_46], %82 {strides = array<i32>} : memref<1x1xf32, #tpu.memory_space<vmem>>, vector<1x1xf32>,
    } else {
    }
    %c3_i32 = arith.constant 3 : i32
    %63 = arith.cmpi eq, %arg1, %c3_i32 : i32
    %64 = arith.extui %63 : i1 to i32
    %c0_i32_35 = arith.constant 0 : i32
    %65 = arith.cmpi ne, %64, %c0_i32_35 : i32
    scf.if %65 {
      %c0_41 = arith.constant 0 : index
      %c0_42 = arith.constant 0 : index
      %74 = vector.load %arg10[%c0_41, %c0_42] : memref<1x1xf32, #tpu.memory_space<vmem>>, vector<1x1xf32>
      %c0_43 = arith.constant 0 : index
      %c0_44 = arith.constant 0 : index
      %75 = vector.load %arg6[%c0_43, %c0_44] : memref<16x1xf32, #tpu.memory_space<vmem>>, vector<16x1xf32>
      %c0_45 = arith.constant 0 : index
      %c0_46 = arith.constant 0 : index
      %76 = vector.load %arg7[%c0_45, %c0_46] : memref<16x1xf32, #tpu.memory_space<vmem>>, vector<16x1xf32>
      %77 = math.log %76 : vector<16x1xf32>
      %78 = arith.addf %75, %77 : vector<16x1xf32>
      %79 = vector.shape_cast %78 : vector<16x1xf32> to vector<1x16x1xf32>
      %cst_47 = arith.constant dense<0.000000e+00> : vector<1xf32>
      %80 = vector.multi_reduction <add>, %79, %cst_47 [1, 2] : vector<1x16x1xf32> to vector<1xf32>
      %81 = vector.shape_cast %80 : vector<1xf32> to vector<1x1x1xf32>
      %82 = vector.extract %81[0, 0, 0] : f32 from vector<1x1x1xf32>
      %83 = vector.broadcast %82 : f32 to vector<1x1xf32>
      %84 = arith.addf %74, %83 : vector<1x1xf32>
      %c0_48 = arith.constant 0 : index
      %c0_49 = arith.constant 0 : index
      %85 = vector.load %arg10[%c0_48, %c0_49] : memref<1x1xf32, #tpu.memory_space<vmem>>, vector<1x1xf32>
      tpu.vector_store %arg10[%c0_48, %c0_49], %84 {strides = array<i32>} : memref<1x1xf32, #tpu.memory_space<vmem>>, vector<1x1xf32>,
    } else {
    }
    %c3_i32_36 = arith.constant 3 : i32
    %66 = arith.cmpi eq, %arg0, %c3_i32_36 : i32
    %67 = arith.extui %66 : i1 to i32
    %c0_i32_37 = arith.constant 0 : i32
    %68 = arith.cmpi ne, %67, %c0_i32_37 : i32
    scf.if %68 {
      %c0_41 = arith.constant 0 : index
      %c0_42 = arith.constant 0 : index
      %74 = vector.load %arg10[%c0_41, %c0_42] : memref<1x1xf32, #tpu.memory_space<vmem>>, vector<1x1xf32>
      %75 = arith.index_cast %arg1 : i32 to index
      %c0_43 = arith.constant 0 : index
      %c0_44 = arith.constant 0 : index
      %76 = vector.load %arg8[%75, %c0_43, %c0_44] : memref<4x1x16xf32, #tpu.memory_space<vmem>>, vector<1x1x16xf32>
      %77 = vector.shape_cast %76 : vector<1x1x16xf32> to vector<1x16xf32>
      %78 = arith.index_cast %arg1 : i32 to index
      %c0_45 = arith.constant 0 : index
      %c0_46 = arith.constant 0 : index
      %79 = vector.load %arg9[%78, %c0_45, %c0_46] : memref<4x1x16xf32, #tpu.memory_space<vmem>>, vector<1x1x16xf32>
      %80 = vector.shape_cast %79 : vector<1x1x16xf32> to vector<1x16xf32>
      %81 = math.log %80 : vector<1x16xf32>
      %82 = arith.addf %77, %81 : vector<1x16xf32>
      %83 = vector.shape_cast %82 : vector<1x16xf32> to vector<1x1x16xf32>
      %cst_47 = arith.constant dense<0.000000e+00> : vector<1xf32>
      %84 = vector.multi_reduction <add>, %83, %cst_47 [1, 2] : vector<1x1x16xf32> to vector<1xf32>
      %85 = vector.shape_cast %84 : vector<1xf32> to vector<1x1x1xf32>
      %86 = vector.extract %85[0, 0, 0] : f32 from vector<1x1x1xf32>
      %87 = vector.broadcast %86 : f32 to vector<1x1xf32>
      %88 = arith.addf %74, %87 : vector<1x1xf32>
      %c0_48 = arith.constant 0 : index
      %c0_49 = arith.constant 0 : index
      %89 = vector.load %arg10[%c0_48, %c0_49] : memref<1x1xf32, #tpu.memory_space<vmem>>, vector<1x1xf32>
      tpu.vector_store %arg10[%c0_48, %c0_49], %88 {strides = array<i32>} : memref<1x1xf32, #tpu.memory_space<vmem>>, vector<1x1xf32>,
    } else {
    }
    %c3_i32_38 = arith.constant 3 : i32
    %69 = arith.cmpi eq, %arg0, %c3_i32_38 : i32
    %c3_i32_39 = arith.constant 3 : i32
    %70 = arith.cmpi eq, %arg1, %c3_i32_39 : i32
    %71 = arith.andi %69, %70 : i1
    %72 = arith.extui %71 : i1 to i32
    %c0_i32_40 = arith.constant 0 : i32
    %73 = arith.cmpi ne, %72, %c0_i32_40 : i32
    scf.if %73 {
      %c0_41 = arith.constant 0 : index
      %c0_42 = arith.constant 0 : index
      %74 = vector.load %arg10[%c0_41, %c0_42] : memref<1x1xf32, #tpu.memory_space<vmem>>, vector<1x1xf32>
      %cst_43 = arith.constant 7.812500e-03 : f32
      %75 = vector.broadcast %cst_43 : f32 to vector<1x1xf32>
      %76 = arith.mulf %74, %75 : vector<1x1xf32>
      %c0_44 = arith.constant 0 : index
      %c0_45 = arith.constant 0 : index
      %77 = vector.load %arg5[%c0_44, %c0_45] : memref<1x1xf32, #tpu.memory_space<vmem>>, vector<1x1xf32>
      tpu.vector_store %arg5[%c0_44, %c0_45], %76 {strides = array<i32>} : memref<1x1xf32, #tpu.memory_space<vmem>>, vector<1x1xf32>,
    } else {
    }
    return
  }
  func.func @transform_0(%arg0: i32, %arg1: i32) -> i32 {
    %c0_i32 = arith.constant 0 : i32
    %c0_i32_0 = arith.constant 0 : i32
    return %c0_i32 : i32
  }
  func.func @transform_1(%arg0: i32, %arg1: i32) -> (i32, i32) {
    %c0_i32 = arith.constant 0 : i32
    %c0_i32_0 = arith.constant 0 : i32
    return %arg0, %c0_i32 : i32, i32
  }
  func.func @transform_2(%arg0: i32, %arg1: i32) -> (i32, i32) {
    %c0_i32 = arith.constant 0 : i32
    %c0_i32_0 = arith.constant 0 : i32
    return %arg1, %c0_i32 : i32, i32
  }
  func.func @transform_3(%arg0: i32, %arg1: i32) -> (i32, i32) {
    %c0_i32 = arith.constant 0 : i32
    %c0_i32_0 = arith.constant 0 : i32
    %c0_i32_1 = arith.constant 0 : i32
    return %c0_i32, %c0_i32_0 : i32, i32
  }
}

</mosaic_0001>

<llo_original>
// kernel: tpu_custom_call.1
$region0: #{tpu_custom_call.1}
  #allocation0 [shape = 'u32[]', space=smem, size = 0x4, offset = 0x4, fixed_abs, tag = 'smem constant byte address 0x4 - core index']
  #allocation1 [shape = 'u32[72,128]{1,0:T(1,128)}', space=vmem, size = 0x9000, scoped, tag = 'internal scratch']
  #allocation2 [shape = 'f32[16,1]{1,0:T(8,128)}', space=vmem, size = 0x2000, scoped, tag = 'scratch operand']
  #allocation3 [shape = 'f32[16,1]{1,0:T(8,128)}', space=vmem, size = 0x2000, scoped, tag = 'scratch operand']
  #allocation4 [shape = 'f32[4,1,16]{2,1,0:T(1,128)}', space=vmem, size = 0x800, scoped, tag = 'scratch operand']
  #allocation5 [shape = 'f32[4,1,16]{2,1,0:T(1,128)}', space=vmem, size = 0x800, scoped, tag = 'scratch operand']
  #allocation6 [shape = 'f32[1,1]{1,0:T(1,128)}', space=vmem, size = 0x200, scoped, tag = 'scratch operand']
  #allocation7 [shape = 'f32[1]{0:T(128)S(6)}', space=smem, size = 0x200, scoped, tag = 'scoped memory for tpu_custom_call.1']
  %s0 = inlined_call_operand.<no memory space> [shape: f32[1], index: 0, kind: input, shape index: {}]
  %s1 = inlined_call_operand.vmem [shape: f32[64,32], index: 1, kind: input, shape index: {}]
  %s2 = inlined_call_operand.vmem [shape: f32[64,32], index: 2, kind: input, shape index: {}]
  %s3 = inlined_call_operand.hbm [shape: f32[1,1], index: 3, kind: output, shape index: {}]
  %s4 = sld [smem:[#allocation0]]
  $region73: #{tpu_custom_call.1} parent=0
    _
  %s6 = ssub.s32 1, %s4
  %s7 = scalar_select 0, %s6, %s4
  %8 = sst [smem:[#allocation7]] %s0
  $region1: #{tpu_custom_call.1} parent=0
    #allocation8 [shape = 'u8[512]{0}', space=vmem, size = 0x400, scoped, tag = 'output window, operand 0, single buffered']
    #allocation9 [shape = 's32[2]{0}', space=sflag, size = 0x8, scoped, tag = 'scoped memory for tpu_custom_call.1']
    %9 = vsyncpa [#allocation9], 0
    loop: start=0, step=1, limit=18
    $region2: #{tpu_custom_call.1} parent=1 // loop_pre_header
      _
    $region3: #{tpu_custom_call.1} parent=1 // loop_header
      %s11 = sphi 0, %s15
      %p12 = scmp.ge.s32.totalorder %s11, 18
      %s18 = sphi 0, %s30
      %s19 = sphi 0, %s26
      %s20 = sphi 0, %s18
      %s21 = sphi 0, %s19
      %s22 = sphi 0, %s20
      %s23 = sphi 0, %s21
      %s31 = sphi 0, %s31
      %s33 = sphi 0, %s31
      %s34 = sphi 0, %s33
      %s48 = sphi 0, %s34
      %s54 = sphi 0, %s56
      %s57 = sphi 0, %s54
      %s58 = sphi 0, %s57
      %s74 = sphi 0, %s58
      %s80 = sphi 0, %s82
      %s83 = sphi 0, %s80
      %s84 = sphi 0, %s83
      %s100 = sphi 0, %s84
      %s104 = sphi 0, %s104
      %s106 = sphi 0, %s104
      %s107 = sphi 0, %s106
      %s121 = sphi 0, %s107
    $region4: #{tpu_custom_call.1} parent=1 // loop_header_branch
      %14 = sbr.rel (%p12) target = $region8
    $region5: #{tpu_custom_call.1} parent=1 // loop_body
      %s16 = ssub.s32 %s11, 1
      %s17 = ssub.s32 %s11, 2
      %s24 = sadd.s32 1, %s19
      %p25 = scmp.ge.s32.totalorder %s24, 4
      %s26 = scalar_select %p25, 0, %s24
      %s27 = sadd.s32 1, %s18
      %s28 = scalar_select %p25, %s27, %s18
      %p29 = scmp.ge.s32.totalorder %s28, 4
      %s30 = scalar_select %p29, 0, %s28
      %s32 = sadd.s32 %s31, 1
      %p35 = scmp.eq.s32.totalorder %s11, 15
      %p36 = scmp.ne.s32.totalorder %s31, %s33
      %p37 = scmp.eq.s32.totalorder %s11, 0
      %p38 = por %p36, %p37
      %p39 = scmp.ne.s32.totalorder %s31, %s33
      %p40 = scmp.eq.s32.totalorder %s16, 15
      %p41 = por %p39, %p40
      %p42 = scmp.ne.s32.totalorder %s33, %s34
      %p43 = scmp.eq.s32.totalorder %s16, 0
      %p44 = por %p42, %p43
      %p45 = scmp.ne.s32.totalorder %s33, %s34
      %p46 = scmp.eq.s32.totalorder %s17, 15
      %p47 = por %p45, %p46
      %p49 = scmp.ne.s32.totalorder %s34, %s48
      %p50 = scmp.eq.s32.totalorder %s17, 0
      %p51 = por %p49, %p50
      %s52 = ssub.s32 %s18, %s30
      %p53 = scmp.eq.s32.totalorder %s52, 0
      %s55 = sadd.s32 %s54, 1
      %s56 = scalar_select %p53, %s54, %s55
      %p59 = pneg %p53
      %p60 = scmp.eq.s32.totalorder %s11, 15
      %p61 = por %p59, %p60
      %p62 = scmp.ne.s32.totalorder %s54, %s57
      %p63 = scmp.eq.s32.totalorder %s11, 0
      %p64 = por %p62, %p63
      %p65 = scmp.ne.s32.totalorder %s54, %s57
      %p66 = scmp.eq.s32.totalorder %s16, 15
      %p67 = por %p65, %p66
      %p68 = scmp.ne.s32.totalorder %s57, %s58
      %p69 = scmp.eq.s32.totalorder %s16, 0
      %p70 = por %p68, %p69
      %p71 = scmp.ne.s32.totalorder %s57, %s58
      %p72 = scmp.eq.s32.totalorder %s17, 15
      %p73 = por %p71, %p72
      %p75 = scmp.ne.s32.totalorder %s58, %s74
      %p76 = scmp.eq.s32.totalorder %s17, 0
      %p77 = por %p75, %p76
      %s78 = ssub.s32 %s19, %s26
      %p79 = scmp.eq.s32.totalorder %s78, 0
      %s81 = sadd.s32 %s80, 1
      %s82 = scalar_select %p79, %s80, %s81
      %p85 = pneg %p79
      %p86 = scmp.eq.s32.totalorder %s11, 15
      %p87 = por %p85, %p86
      %p88 = scmp.ne.s32.totalorder %s80, %s83
      %p89 = scmp.eq.s32.totalorder %s11, 0
      %p90 = por %p88, %p89
      %p91 = scmp.ne.s32.totalorder %s80, %s83
      %p92 = scmp.eq.s32.totalorder %s16, 15
      %p93 = por %p91, %p92
      %p94 = scmp.ne.s32.totalorder %s83, %s84
      %p95 = scmp.eq.s32.totalorder %s16, 0
      %p96 = por %p94, %p95
      %p97 = scmp.ne.s32.totalorder %s83, %s84
      %p98 = scmp.eq.s32.totalorder %s17, 15
      %p99 = por %p97, %p98
      %p101 = scmp.ne.s32.totalorder %s84, %s100
      %p102 = scmp.eq.s32.totalorder %s17, 0
      %p103 = por %p101, %p102
      %s105 = sadd.s32 %s104, 1
      %p108 = scmp.eq.s32.totalorder %s11, 15
      %p109 = scmp.ne.s32.totalorder %s104, %s106
      %p110 = scmp.eq.s32.totalorder %s11, 0
      %p111 = por %p109, %p110
      %p112 = scmp.ne.s32.totalorder %s104, %s106
      %p113 = scmp.eq.s32.totalorder %s16, 15
      %p114 = por %p112, %p113
      %p115 = scmp.ne.s32.totalorder %s106, %s107
      %p116 = scmp.eq.s32.totalorder %s16, 0
      %p117 = por %p115, %p116
      %p118 = scmp.ne.s32.totalorder %s106, %s107
      %p119 = scmp.eq.s32.totalorder %s17, 15
      %p120 = por %p118, %p119
      %p122 = scmp.ne.s32.totalorder %s107, %s121
      %p123 = scmp.eq.s32.totalorder %s17, 0
      %p124 = por %p122, %p123
      %p125 = scmp.le.s32.totalorder 1, %s11
      %p126 = scmp.lt.s32.totalorder %s11, 17
      %p127 = pnand %p125, %p126
      %p128 = pneg %p127
      // Predicated region
      $region9: #{tpu_custom_call.1} parent=5 // pred_check
        _
      $region10: #{tpu_custom_call.1} parent=5 // pred_check_branch
        %130 = sbr.rel (%p127) target = $region12
      $region11: #{tpu_custom_call.1} parent=5 // pred_region
        %s131 = ssub.s32 %s11, 1
        // Predicated region
        $region13: #{tpu_custom_call.1} parent=11 // pred_check
          %p132 = pneg %p44
        $region14: #{tpu_custom_call.1} parent=11 // pred_check_branch
          %134 = sbr.rel (%p132) target = $region16
        $region15: #{tpu_custom_call.1} parent=11 // pred_region
          _
        $region16: #{tpu_custom_call.1} parent=11 // pred_fallthru
          _
      $region12: #{tpu_custom_call.1} parent=5 // pred_fallthru
        _
      %p135 = scmp.lt.s32.totalorder %s11, 16
      // Predicated region
      $region17: #{tpu_custom_call.1} parent=5 // pred_check
        %p136 = pneg %p135
      $region18: #{tpu_custom_call.1} parent=5 // pred_check_branch
        %138 = sbr.rel (%p136) target = $region20
      $region19: #{tpu_custom_call.1} parent=5 // pred_region
        // Predicated region
        $region21: #{tpu_custom_call.1} parent=19 // pred_check
          %p139 = pneg %p64
        $region22: #{tpu_custom_call.1} parent=19 // pred_check_branch
          %141 = sbr.rel (%p139) target = $region24
        $region23: #{tpu_custom_call.1} parent=19 // pred_region
          %s142 = smul.u32 2, %s18
          %p143 = scmp.lt.s32.totalorder %s142, 7
          %s144 = scalar_select %p143, %s142, 7
          %s145 = smul.addr %s144, 8
          %s146 = scalar_lea.vmem %s1, %s145
          %s147 = smul.u32 2, %s18
        $region24: #{tpu_custom_call.1} parent=19 // pred_fallthru
          _
        // Predicated region
        $region25: #{tpu_custom_call.1} parent=19 // pred_check
          %p148 = pneg %p90
        $region26: #{tpu_custom_call.1} parent=19 // pred_check_branch
          %150 = sbr.rel (%p148) target = $region28
        $region27: #{tpu_custom_call.1} parent=19 // pred_region
          %s151 = smul.u32 2, %s19
          %p152 = scmp.lt.s32.totalorder %s151, 7
          %s153 = scalar_select %p152, %s151, 7
          %s154 = smul.addr %s153, 8
          %s155 = scalar_lea.vmem %s2, %s154
          %s156 = smul.u32 2, %s19
        $region28: #{tpu_custom_call.1} parent=19 // pred_fallthru
          _
      $region20: #{tpu_custom_call.1} parent=5 // pred_fallthru
        _
      %p157 = scmp.le.s32.totalorder 1, %s11
      %p158 = scmp.lt.s32.totalorder %s11, 17
      %p159 = pnand %p157, %p158
      %p160 = pneg %p159
      // Predicated region
      $region29: #{tpu_custom_call.1} parent=5 // pred_check
        _
      $region30: #{tpu_custom_call.1} parent=5 // pred_check_branch
        %162 = sbr.rel (%p159) target = $region32
      $region31: #{tpu_custom_call.1} parent=5 // pred_region
        %s163 = ssub.s32 %s11, 1
        %p164 = pneg %p44
        %p165 = pneg %p41
        %s166 = smul.u32 2, %s20
        %p167 = scmp.lt.s32.totalorder %s166, 7
        %s168 = scalar_select %p167, %s166, 7
        %s169 = smul.addr %s168, 8
        %s170 = scalar_lea.vmem %s1, %s169
        %p171 = pneg %p70
        %p172 = pneg %p67
        %s173 = smul.u32 2, %s21
        %p174 = scmp.lt.s32.totalorder %s173, 7
        %s175 = scalar_select %p174, %s173, 7
        %s176 = smul.addr %s175, 8
        %s177 = scalar_lea.vmem %s2, %s176
        %p178 = pneg %p96
        %p179 = pneg %p93
        %p180 = pneg %p117
        %p181 = pneg %p114
        %s182 = smul.u32 2, %s20
        %p183 = scmp.lt.s32.totalorder %s182, 7
        %s184 = scalar_select %p183, %s182, 7
        %s185 = smul.addr %s184, 8
        %s186 = scalar_lea.vmem %s1, %s185
        %s187 = smul.u32 2, %s20
        %s188 = smul.u32 2, %s21
        %p189 = scmp.lt.s32.totalorder %s188, 7
        %s190 = scalar_select %p189, %s188, 7
        %s191 = smul.addr %s190, 8
        %s192 = scalar_lea.vmem %s2, %s191
        %s193 = smul.u32 2, %s21
        %s194 = sld [smem:[#allocation7]]
        %v195 = vld [vmem:[%s186] sm:$0xff]
        %v196 = vld [vmem:[%s186 + $0x8] sm:$0xff]
        %v197 = vld [vmem:[%s192] sm:$0xff]
        %v198 = vld [vmem:[%s192 + $0x8] sm:$0xff]
        %v199 = vstv %s194
        %v200 = vmul.f32 %v195, %v199
        %v201 = vmul.f32 %v196, %v199
        %vm202 = vcmask 261120
        %v204 = vsel %vm202, %v200, 0
        %v207 = vsel %vm202, %v201, 0
        %v210 = vsel %vm202, %v197, 0
        %v213 = vsel %vm202, %v198, 0
        %215 = vmatpush.xpose.msra.mxu0 0.0
        %216 = vmatpush.xpose.msra.mxu0 0.0
        %217 = vmatpush.xpose.msra.mxu0 0.0
        %218 = vmatpush.xpose.msra.mxu0 0.0
        %219 = vmatpush.xpose.msra.mxu0 0.0
        %220 = vmatpush.xpose.msra.mxu0 0.0
        %221 = vmatpush.xpose.msra.mxu0 0.0
        %222 = vmatpush.xpose.msra.mxu0 0.0
        %223 = vmatpush.xpose.msra.mxu0 0.0
        %224 = vmatpush.xpose.msra.mxu0 0.0
        %225 = vmatpush.xpose.msra.mxu0 0.0
        %226 = vmatpush.xpose.msra.mxu0 0.0
        %227 = vmatpush.xpose.msra.mxu0 0.0
        %228 = vmatpush.xpose.msra.mxu0 0.0
        %229 = vmatpush.xpose.msra.mxu0 %v213
        %230 = vmatpush.xpose.msra.mxu0 %v210
        %231 = vmatmul.f32.gmra.mxu0 %v204
        %v232 = vpop.f32.mrf.mxu0
        %v233 = vadd.f32 0.0, %v232
        %234 = vmatmul.f32.gmra.mxu0 %v207
        %v235 = vpop.f32.mrf.mxu0
        %v236 = vadd.f32 0.0, %v235
        %237 = vdwg.mxu0
        %p238 = scmp.eq.s32.totalorder %s20, 0
        %p239 = scmp.eq.s32.totalorder %s21, 0
        %p240 = pnand %p238, %p239
        %p241 = pneg %p240
        // Predicated region
        $region33: #{tpu_custom_call.1} parent=31 // pred_check
          _
        $region34: #{tpu_custom_call.1} parent=31 // pred_check_branch
          %243 = sbr.rel (%p240) target = $region36
        $region35: #{tpu_custom_call.1} parent=31 // pred_region
          %vm244 = vcmask 0
          %245 = vst.msk [vmem:[#allocation6] sm:$0x1] %vm244, 0.0
        $region36: #{tpu_custom_call.1} parent=31 // pred_fallthru
          _
        // Predicated region
        $region37: #{tpu_custom_call.1} parent=31 // pred_check
          %p246 = pneg %p239
        $region38: #{tpu_custom_call.1} parent=31 // pred_check_branch
          %248 = sbr.rel (%p246) target = $region40
        $region39: #{tpu_custom_call.1} parent=31 // pred_region
          %vm249 = vcmask 7168
          %250 = vst.msk [vmem:[#allocation2] sm:$0xff] %vm249, -inf
          %251 = vst.msk [vmem:[#allocation2 + $0x8] sm:$0xff] %vm249, -inf
          %252 = vst.msk [vmem:[#allocation3] sm:$0xff] %vm249, 0.0
          %253 = vst.msk [vmem:[#allocation3 + $0x8] sm:$0xff] %vm249, 0.0
        $region40: #{tpu_custom_call.1} parent=31 // pred_fallthru
          _
        %vm254 = vcmask 130048
        %v255 = vsel %vm254, %v233, -inf
        %256 = vmax.xlane.f32.xlu0 %v255
        %v257 = vpop.xlane.xlu0 %256
        %v258 = vsel %vm254, %v236, -inf
        %259 = vmax.xlane.f32.xlu0 %v258
        %v260 = vpop.xlane.xlu0 %259
        %v261 = vld [vmem:[#allocation2] sm:$0xff]
        %v262 = vld [vmem:[#allocation2 + $0x8] sm:$0xff]
        %v263 = vmax.f32 %v261, %v257
        %v264 = vmax.f32 %v262, %v260
        %v265 = vld [vmem:[#allocation3] sm:$0xff]
        %v266 = vld [vmem:[#allocation3 + $0x8] sm:$0xff]
        %v267 = vsub.f32 %v261, %v263
        %v268 = vsub.f32 %v262, %v264
        %v269 = vmul.f32 %v267, 1.442695
        %v270 = vpow.pop %v269
        %v271 = vmul.f32 %v268, 1.442695
        %v272 = vpow.pop %v271
        %v273 = vmul.f32 %v265, %v270
        %v274 = vmul.f32 %v266, %v272
        %276 = vset.pattern.permute.xlu0 0
        %277 = vperm.xlu0 %276, %v263
        %v278 = vpop.permute.xlu0 %277
        %281 = vset.pattern.permute.xlu0 0
        %282 = vperm.xlu0 %281, %v264
        %v283 = vpop.permute.xlu0 %282
        %v285 = vsub.f32 %v233, %v278
        %v286 = vsub.f32 %v236, %v283
        %v287 = vmul.f32 %v285, 1.442695
        %v288 = vpow.pop %v287
        %v289 = vmul.f32 %v286, 1.442695
        %v290 = vpow.pop %v289
        %v291 = vsel %vm254, %v288, 0.0
        %292 = vadd.xlane.f32.xlu0 %v291
        %v293 = vpop.xlane.xlu0 %292
        %v294 = vsel %vm254, %v290, 0.0
        %295 = vadd.xlane.f32.xlu0 %v294
        %v296 = vpop.xlane.xlu0 %295
        %v297 = vadd.f32 %v273, %v293
        %v298 = vadd.f32 %v274, %v296
        %vm299 = vcmask 7168
        %300 = vst.msk [vmem:[#allocation3] sm:$0xff] %vm299, %v297
        %301 = vst.msk [vmem:[#allocation3 + $0x8] sm:$0xff] %vm299, %v298
        %302 = vst.msk [vmem:[#allocation2] sm:$0xff] %vm299, %v263
        %303 = vst.msk [vmem:[#allocation2 + $0x8] sm:$0xff] %vm299, %v264
        // Predicated region
        $region41: #{tpu_custom_call.1} parent=31 // pred_check
          %p304 = pneg %p238
        $region42: #{tpu_custom_call.1} parent=31 // pred_check_branch
          %306 = sbr.rel (%p304) target = $region44
        $region43: #{tpu_custom_call.1} parent=31 // pred_region
          %s307 = scalar_lea.vmem [#allocation4], %s21
          %vm308 = vcmask 122880
          %309 = vst.msk [vmem:[%s307] sm:$0x1] %vm308, -inf
          %s310 = scalar_lea.vmem [#allocation5], %s21
          %311 = vst.msk [vmem:[%s310] sm:$0x1] %vm308, 0.0
        $region44: #{tpu_custom_call.1} parent=31 // pred_fallthru
          _
        %s312 = scalar_lea.vmem [#allocation4], %s21
        %v313 = vld [vmem:[%s312] sm:$0x1]
        %s314 = scalar_lea.vmem [#allocation5], %s21
        %v315 = vld [vmem:[%s314] sm:$0x1]
        %v316 = vmax.f32 %v255, %v258
        %v317 = vrot.slane %v316, 4
        %v318 = vmax.f32 %v316, %v317
        %v319 = vrot.slane %v318, 2
        %v320 = vmax.f32 %v318, %v319
        %v321 = vrot.slane %v320, 1
        %v322 = vmax.f32 %v320, %v321
        %v323 = vmax.f32 %v313, %v322
        %v324 = vsub.f32 %v313, %v323
        %v325 = vmul.f32 %v324, 1.442695
        %v326 = vpow.pop %v325
        %v327 = vmul.f32 %v315, %v326
        %v329 = vperm.slane %v323, 0
        %v331 = vsub.f32 %v233, %v329
        %v332 = vsub.f32 %v236, %v329
        %v333 = vmul.f32 %v331, 1.442695
        %v334 = vpow.pop %v333
        %v335 = vmul.f32 %v332, 1.442695
        %v336 = vpow.pop %v335
        %v337 = vsel %vm254, %v334, 0.0
        %v338 = vsel %vm254, %v336, 0.0
        %v339 = vadd.f32 %v337, %v338
        %v340 = vrot.slane %v339, 4
        %v341 = vadd.f32 %v339, %v340
        %v342 = vrot.slane %v341, 2
        %v343 = vadd.f32 %v341, %v342
        %v344 = vrot.slane %v343, 1
        %v345 = vadd.f32 %v343, %v344
        %v346 = vadd.f32 %v327, %v345
        %vm347 = vcmask 122880
        %348 = vst.msk [vmem:[%s314] sm:$0x1] %vm347, %v346
        %349 = vst.msk [vmem:[%s312] sm:$0x1] %vm347, %v323
        %p350 = scmp.eq.s32.totalorder %s20, %s21
        // Predicated region
        $region45: #{tpu_custom_call.1} parent=31 // pred_check
          %p351 = pneg %p350
        $region46: #{tpu_custom_call.1} parent=31 // pred_check_branch
          %353 = sbr.rel (%p351) target = $region48
        $region47: #{tpu_custom_call.1} parent=31 // pred_region
          %v354 = vmul.f32 %v200, %v197
          %v355 = vmul.f32 %v201, %v198
          %v356 = vsel %vm202, %v354, 0.0
          %v357 = vsel %vm202, %v355, 0.0
          %v358 = vadd.f32 %v356, %v357
          %359 = vadd.xlane.f32.xlu0 %v358
          %v360 = vpop.xlane.xlu0 %359
          %v361 = vrot.slane %v360, 4
          %v362 = vadd.f32 %v360, %v361
          %v363 = vrot.slane %v362, 2
          %v364 = vadd.f32 %v362, %v363
          %v365 = vrot.slane %v364, 1
          %v366 = vadd.f32 %v364, %v365
          %s367 = vtos %v366
          %v368 = vld [vmem:[#allocation6] sm:$0x1]
          %s369 = smul.f32 %s367, -2.0
          %v370 = vstv %s369
          %v371 = vadd.f32 %v368, %v370
          %vm372 = vcmask 0
          %373 = vst.msk [vmem:[#allocation6] sm:$0x1] %vm372, %v371
        $region48: #{tpu_custom_call.1} parent=31 // pred_fallthru
          _
        %p374 = scmp.eq.s32.totalorder %s21, 3
        // Predicated region
        $region49: #{tpu_custom_call.1} parent=31 // pred_check
          %p375 = pneg %p374
        $region50: #{tpu_custom_call.1} parent=31 // pred_check_branch
          %377 = sbr.rel (%p375) target = $region52
        $region51: #{tpu_custom_call.1} parent=31 // pred_region
          %v378 = vld [vmem:[#allocation6] sm:$0x1]
          %v379 = vld [vmem:[#allocation2] sm:$0xff]
          %v380 = vld [vmem:[#allocation2 + $0x8] sm:$0xff]
          %v381 = vld [vmem:[#allocation3] sm:$0xff]
          %v382 = vld [vmem:[#allocation3 + $0x8] sm:$0xff]
          %v383 = vlog2.pop %v381
          %v384 = vmul.f32 %v383, 0.6931472
          %v385 = vlog2.pop %v382
          %v386 = vmul.f32 %v385, 0.6931472
          %v387 = vadd.f32 %v379, %v384
          %v388 = vadd.f32 %v380, %v386
          %v389 = vsel %vm299, %v387, 0.0
          %v390 = vsel %vm299, %v388, 0.0
          %v391 = vadd.f32 %v389, %v390
          %392 = vadd.xlane.f32.xlu0 %v391
          %v393 = vpop.xlane.xlu0 %392
          %v394 = vrot.slane %v393, 4
          %v395 = vadd.f32 %v393, %v394
          %v396 = vrot.slane %v395, 2
          %v397 = vadd.f32 %v395, %v396
          %v398 = vrot.slane %v397, 1
          %v399 = vadd.f32 %v397, %v398
          %s400 = vtos %v399
          %v401 = vstv %s400
          %v402 = vadd.f32 %v378, %v401
          %vm403 = vcmask 0
          %404 = vst.msk [vmem:[#allocation6] sm:$0x1] %vm403, %v402
        $region52: #{tpu_custom_call.1} parent=31 // pred_fallthru
          _
        %p405 = scmp.eq.s32.totalorder %s20, 3
        // Predicated region
        $region53: #{tpu_custom_call.1} parent=31 // pred_check
          %p406 = pneg %p405
        $region54: #{tpu_custom_call.1} parent=31 // pred_check_branch
          %408 = sbr.rel (%p406) target = $region56
        $region55: #{tpu_custom_call.1} parent=31 // pred_region
          %v409 = vld [vmem:[#allocation6] sm:$0x1]
          %v410 = vld [vmem:[%s312] sm:$0x1]
          %v411 = vld [vmem:[%s314] sm:$0x1]
          %v412 = vlog2.pop %v411
          %v413 = vmul.f32 %v412, 0.6931472
          %v414 = vadd.f32 %v410, %v413
          %v415 = vsel %vm347, %v414, 0.0
          %416 = vadd.xlane.f32.xlu0 %v415
          %v417 = vpop.xlane.xlu0 %416
          %v418 = vrot.slane %v417, 4
          %v419 = vadd.f32 %v417, %v418
          %v420 = vrot.slane %v419, 2
          %v421 = vadd.f32 %v419, %v420
          %v422 = vrot.slane %v421, 1
          %v423 = vadd.f32 %v421, %v422
          %s424 = vtos %v423
          %v425 = vstv %s424
          %v426 = vadd.f32 %v409, %v425
          %vm427 = vcmask 0
          %428 = vst.msk [vmem:[#allocation6] sm:$0x1] %vm427, %v426
        $region56: #{tpu_custom_call.1} parent=31 // pred_fallthru
          _
        %p429 = pnand %p405, %p374
        %p430 = pneg %p429
        // Predicated region
        $region57: #{tpu_custom_call.1} parent=31 // pred_check
          _
        $region58: #{tpu_custom_call.1} parent=31 // pred_check_branch
          %432 = sbr.rel (%p429) target = $region60
        $region59: #{tpu_custom_call.1} parent=31 // pred_region
          %v433 = vld [vmem:[#allocation6] sm:$0x1]
          %v434 = vmul.f32 %v433, 0.0078125
          %vm435 = vcmask 0
          %436 = vst.msk [vmem:[#allocation8] sm:$0x1] %vm435, %v434
        $region60: #{tpu_custom_call.1} parent=31 // pred_fallthru
          _
        // Predicated region
        $region61: #{tpu_custom_call.1} parent=31 // pred_check
          %p437 = pneg %p114
        $region62: #{tpu_custom_call.1} parent=31 // pred_check_branch
          %439 = sbr.rel (%p437) target = $region64
        $region63: #{tpu_custom_call.1} parent=31 // pred_region
          %441 = vsyncadd [#allocation9], 0
          %s443 = sshll.u32 [#allocation8], 4
          %s444 = int_to_ptr.vmem [resolvable:$true] %s443
          %s445 = sshll.u32 %s3, 4
          %s446 = int_to_ptr.hbm [resolvable:$true] %s445
          %448 = dma.vmem_to_hbm [thread:$0]  %s444, 16, %s446, [#allocation9]
        $region64: #{tpu_custom_call.1} parent=31 // pred_fallthru
          _
        // Predicated region
        $region65: #{tpu_custom_call.1} parent=31 // pred_check
          %p449 = pneg %p114
        $region66: #{tpu_custom_call.1} parent=31 // pred_check_branch
          %451 = sbr.rel (%p449) target = $region68
        $region67: #{tpu_custom_call.1} parent=31 // pred_region
          %453 = dma.done [#allocation9], 16
        $region68: #{tpu_custom_call.1} parent=31 // pred_fallthru
          _
      $region32: #{tpu_custom_call.1} parent=5 // pred_fallthru
        _
      %p454 = scmp.le.s32.totalorder 2, %s11
      // Predicated region
      $region69: #{tpu_custom_call.1} parent=5 // pred_check
        %p455 = pneg %p454
      $region70: #{tpu_custom_call.1} parent=5 // pred_check_branch
        %457 = sbr.rel (%p455) target = $region72
      $region71: #{tpu_custom_call.1} parent=5 // pred_region
        %s458 = ssub.s32 %s11, 2
      $region72: #{tpu_custom_call.1} parent=5 // pred_fallthru
        _
    $region6: #{tpu_custom_call.1} parent=1 // loop_footer
      %s15 = sadd.s32 1, %s11
    $region7: #{tpu_custom_call.1} parent=1 // loop_footer_branch
      %10 = sbr.rel target = $region3
    $region8: #{tpu_custom_call.1} parent=1 // loop_exit
      _
    %459 = vsyncpa [#allocation9], 1
    %s460 = scalar_lea.sflag [#allocation9], 1
    %461 = vsyncpa %s460, 1

</llo_original>
